<compile_context>
chip_gen: v7x
topology: tpu7x:2x2x1
jax: 0.10.0
libtpu: 0.0.40
codegen_flags: <defaults>
</compile_context>

<pallas_src>
import math
import functools

import jax
import jax.numpy as jnp
from jax import lax
from jax.experimental import pallas as pl
from jax.experimental.pallas import tpu as pltpu


def _mha_kernel(xq_ref, xkv_ref, bias_ref,
                wq_ref, bq_ref, wkv_ref, bkv_ref,
                out_ref, *, head, q_k_size, v_size):
    b_blk, Lq, emb = xq_ref.shape
    _, Lk, _ = xkv_ref.shape
    hqk = head * q_k_size
    hv = head * v_size

    # Fold (b_blk, L) onto the sublane/M dimension: ONE wide MXU matmul per
    # projection covers every batch in this block.  Operands in bf16, f32 acc.
    xq = xq_ref[...].reshape(b_blk * Lq, emb).astype(jnp.bfloat16)
    xkv = xkv_ref[...].reshape(b_blk * Lk, emb).astype(jnp.bfloat16)

    # Q projection (1/sqrt(q_k_size) already folded into wq/bq by the wrapper).
    q = jnp.dot(xq, wq_ref[...], preferred_element_type=jnp.float32) + bq_ref[...]

    # Fused K|V projection: single 128-lane-dense matmul, then static lane slices.
    kv = jnp.dot(xkv, wkv_ref[...], preferred_element_type=jnp.float32) + bkv_ref[...]
    k = kv[:, :hqk]
    v = kv[:, hqk:]

    # Back to bf16 for the score / PV MXU ops; softmax path stays f32.
    qb = q.astype(jnp.bfloat16).reshape(b_blk, Lq, hqk)
    kb = k.astype(jnp.bfloat16).reshape(b_blk, Lk, hqk)
    vb = v.astype(jnp.bfloat16).reshape(b_blk, Lk, hv)

    # Contract last dim of q against last dim of k (no explicit transpose / XLU).
    dn = (((1,), (1,)), ((), ()))

    for b in range(b_blk):               # static, unrolled at trace time
        bias = bias_ref[b].astype(jnp.float32)      # (Lq, Lk) additive: 0 / -1e9
        zs = []
        for h in range(head):            # head is small & static
            qh = qb[b, :, h * q_k_size:(h + 1) * q_k_size]   # (Lq, qk)
            kh = kb[b, :, h * q_k_size:(h + 1) * q_k_size]   # (Lk, qk)
            vh = vb[b, :, h * v_size:(h + 1) * v_size]       # (Lk, v)

            s = lax.dot_general(qh, kh, dimension_numbers=dn,
                                preferred_element_type=jnp.float32)   # (Lq, Lk)
            s = s + bias

            # Numerically stable softmax in f32; divide -> EUP approx reciprocal.
            m = jnp.max(s, axis=-1, keepdims=True)
            p = jnp.exp(s - m)
            inv = pl.reciprocal(jnp.sum(p, axis=-1, keepdims=True), approx=True)
            attn = (p * inv).astype(jnp.bfloat16)

            zs.append(jnp.dot(attn, vh, preferred_element_type=jnp.float32))  # (Lq, v)

        # Lane-dense store of the final layout: (Lq, head*v).
        out_ref[b] = jnp.concatenate(zs, axis=-1).astype(out_ref.dtype)


def multihead_attention(x_q, x_k_v, attn_mask, params, *, head, q_k_size, v_size):
    B, Lq, emb = x_q.shape
    _, Lk, _ = x_k_v.shape
    wq, bq, wk, bk, wv, bv = params  # (head, emb, d) weights, (head, 1, d) biases
    hqk = head * q_k_size
    hv = head * v_size

    # ---- parameter prep (outside the kernel, plain JAX ops) ----
    scale = 1.0 / math.sqrt(q_k_size)
    # Fuse heads into the lane dim: (head, emb, d) -> (emb, head*d).
    # Fold the score scale into wq/bq IN F32, then cast the weight slabs to bf16
    # (biases stay f32: they are added after the f32-accumulated matmul).
    wq_f = ((jnp.transpose(wq, (1, 0, 2)) * scale)
            .reshape(emb, hqk).astype(jnp.bfloat16))
    bq_f = (bq * scale).reshape(1, hqk).astype(jnp.float32)
    # Fuse K|V into one (emb, head*(qk+v)) = 128-lane slab.
    wkv_f = jnp.concatenate(
        [jnp.transpose(wk, (1, 0, 2)).reshape(emb, hqk),
         jnp.transpose(wv, (1, 0, 2)).reshape(emb, hv)], axis=-1).astype(jnp.bfloat16)
    bkv_f = jnp.concatenate(
        [bk.reshape(1, hqk), bv.reshape(1, hv)], axis=-1).astype(jnp.float32)

    # Additive mask bias in bf16 (upcast in-kernel): nonzero mask entry => -1e9.
    mask_bias = jnp.where(attn_mask != 0, -1e9, 0.0).astype(jnp.bfloat16)

    # Batch blocking: fold batches into the matmul M dimension, but keep 2 grid
    # steps (marked "parallel") when possible so v7x's two TensorCores both work.
    n_steps = 2 if (B >= 2 and B % 2 == 0) else 1
    b_blk = B // n_steps

    kernel = functools.partial(_mha_kernel, head=head,
                               q_k_size=q_k_size, v_size=v_size)

    out = pl.pallas_call(
        kernel,
        out_shape=jax.ShapeDtypeStruct((B, Lq, hv), jnp.float32),
        grid_spec=pltpu.PrefetchScalarGridSpec(
            num_scalar_prefetch=0,
            grid=(n_steps,),
            in_specs=[
                pl.BlockSpec((b_blk, Lq, emb), lambda i: (i, 0, 0)),   # x_q
                pl.BlockSpec((b_blk, Lk, emb), lambda i: (i, 0, 0)),   # x_k_v
                pl.BlockSpec((b_blk, Lq, Lk), lambda i: (i, 0, 0)),    # mask bias (bf16)
                pl.BlockSpec((emb, hqk), lambda i: (0, 0)),            # wq (fused heads, bf16)
                pl.BlockSpec((1, hqk), lambda i: (0, 0)),              # bq (f32)
                pl.BlockSpec((emb, hqk + hv), lambda i: (0, 0)),       # wk|wv fused (bf16)
                pl.BlockSpec((1, hqk + hv), lambda i: (0, 0)),         # bk|bv fused (f32)
            ],
            out_specs=pl.BlockSpec((b_blk, Lq, hv), lambda i: (i, 0, 0)),
        ),
        compiler_params=pltpu.CompilerParams(
            dimension_semantics=("parallel",)),
    )(x_q, x_k_v, mask_bias, wq_f, bq_f, wkv_f, bkv_f)

    return out  # (B, Lq, head*v_size) == torch z.transpose(1,2).reshape(...)


def _reference(x_q, x_k_v, attn_mask, params, *, head, q_k_size, v_size):
    """Pure-JAX f32 reference mirroring the PyTorch forward (masked_fill semantics)."""
    wq, bq, wk, bk, wv, bv = params
    B, Lq, emb = x_q.shape
    q = jnp.einsum('ble,hed->bhld', x_q, wq) + bq[:, None, 0, :]
    k = jnp.einsum('ble,hed->bhld', x_k_v, wk) + bk[:, None, 0, :]
    v = jnp.einsum('ble,hed->bhld', x_k_v, wv) + bv[:, None, 0, :]
    scores = jnp.einsum('bhqd,bhkd->bhqk', q, k) / math.sqrt(q_k_size)
    scores = jnp.where(attn_mask[:, None, :, :] != 0, -1e9, scores)
    attn = jax.nn.softmax(scores, axis=-1)
    z = jnp.einsum('bhqk,bhkd->bhqd', attn, v)
    return jnp.transpose(z, (0, 2, 1, 3)).reshape(B, Lq, head * v_size)


if __name__ == "__main__":
    # Module hyperparameters.
    emb_size, q_k_size, v_size, head = 32, 16, 16, 4
    B, Lq, Lk = 2, 8, 8

    key = jax.random.PRNGKey(0)
    keys = jax.random.split(key, 10)

    # Deterministic parameter init (shapes from nn.Linear(emb, head*d), pre-transposed).
    scale = 1.0 / math.sqrt(emb_size)
    wq = jax.random.uniform(keys[0], (head, emb_size, q_k_size), jnp.float32, -scale, scale)
    bq = jax.random.uniform(keys[1], (head, 1, q_k_size), jnp.float32, -scale, scale)
    wk = jax.random.uniform(keys[2], (head, emb_size, q_k_size), jnp.float32, -scale, scale)
    bk = jax.random.uniform(keys[3], (head, 1, q_k_size), jnp.float32, -scale, scale)
    wv = jax.random.uniform(keys[4], (head, emb_size, v_size), jnp.float32, -scale, scale)
    bv = jax.random.uniform(keys[5], (head, 1, v_size), jnp.float32, -scale, scale)
    params = (wq, bq, wk, bk, wv, bv)

    # Example inputs.
    x_q = jax.random.normal(keys[6], (B, Lq, emb_size), jnp.float32)
    x_k_v = jax.random.normal(keys[7], (B, Lk, emb_size), jnp.float32)
    attn_mask = (jax.random.uniform(keys[8], (B, Lq, Lk)) < 0.3).astype(jnp.int32)
    # Keep at least one unmasked key per query row so additive-bias masking matches
    # torch's masked_fill (fully-masked rows are degenerate in both frameworks).
    attn_mask = attn_mask.at[:, :, 0].set(0)

    out = multihead_attention(x_q, x_k_v, attn_mask, params,
                              head=head, q_k_size=q_k_size, v_size=v_size)
    out = jax.block_until_ready(out)

    ref = _reference(x_q, x_k_v, attn_mask, params,
                     head=head, q_k_size=q_k_size, v_size=v_size)
    assert out.shape == (B, Lq, head * v_size)
    # Tolerance accounts for bf16 MXU operands (f32 accumulation) + EUP approx
    # reciprocal in the softmax vs. the exact-f32 reference.
    assert jnp.allclose(out, ref, atol=5e-2, rtol=5e-2), \
        f"max abs err = {jnp.max(jnp.abs(out - ref))}"

    print("KERNEL_OK")
</pallas_src>

<mosaic_0001>
module attributes {stable_mosaic.version = 11 : i64} {
  func.func @_mha_kernel(%arg0: i32, %arg1: memref<1x8x32xf32, #tpu.memory_space<vmem>>, %arg2: memref<1x8x32xf32, #tpu.memory_space<vmem>>, %arg3: memref<1x8x8xbf16, #tpu.memory_space<vmem>>, %arg4: memref<32x64xbf16, #tpu.memory_space<vmem>>, %arg5: memref<1x64xf32, #tpu.memory_space<vmem>>, %arg6: memref<32x128xbf16, #tpu.memory_space<vmem>>, %arg7: memref<1x128xf32, #tpu.memory_space<vmem>>, %arg8: memref<1x8x64xf32, #tpu.memory_space<vmem>>) attributes {dimension_semantics = [#tpu.dimension_semantics<parallel>], iteration_bounds = array<i64: 2>, scalar_prefetch = 0 : i64, scratch_operands = 0 : i64, tpu.core_type = #tpu.core_type<tc>, window_params = [{transform_indices = @transform_0, window_bounds = array<i64: 1, 8, 32>}, {transform_indices = @transform_1, window_bounds = array<i64: 1, 8, 32>}, {transform_indices = @transform_2, window_bounds = array<i64: 1, 8, 8>}, {pipeline_mode = #tpu.pipeline_mode<synchronous>, transform_indices = @transform_3, window_bounds = array<i64: 32, 64>}, {pipeline_mode = #tpu.pipeline_mode<synchronous>, transform_indices = @transform_4, window_bounds = array<i64: 1, 64>}, {pipeline_mode = #tpu.pipeline_mode<synchronous>, transform_indices = @transform_5, window_bounds = array<i64: 32, 128>}, {pipeline_mode = #tpu.pipeline_mode<synchronous>, transform_indices = @transform_6, window_bounds = array<i64: 1, 128>}, {transform_indices = @transform_7, window_bounds = array<i64: 1, 8, 64>}]} {
    %c0 = arith.constant 0 : index
    %c0_0 = arith.constant 0 : index
    %c0_1 = arith.constant 0 : index
    %0 = vector.load %arg1[%c0, %c0_0, %c0_1] : memref<1x8x32xf32, #tpu.memory_space<vmem>>, vector<1x8x32xf32>
    %1 = vector.shape_cast %0 : vector<1x8x32xf32> to vector<8x32xf32>
    %2 = arith.truncf %1 : vector<8x32xf32> to vector<8x32xbf16>
    %c0_2 = arith.constant 0 : index
    %c0_3 = arith.constant 0 : index
    %c0_4 = arith.constant 0 : index
    %3 = vector.load %arg2[%c0_2, %c0_3, %c0_4] : memref<1x8x32xf32, #tpu.memory_space<vmem>>, vector<1x8x32xf32>
    %4 = vector.shape_cast %3 : vector<1x8x32xf32> to vector<8x32xf32>
    %5 = arith.truncf %4 : vector<8x32xf32> to vector<8x32xbf16>
    %c0_5 = arith.constant 0 : index
    %c0_6 = arith.constant 0 : index
    %6 = vector.load %arg4[%c0_5, %c0_6] : memref<32x64xbf16, #tpu.memory_space<vmem>>, vector<32x64xbf16>
    %cst = arith.constant dense<0.000000e+00> : vector<8x64xf32>
    %7 = tpu.matmul %2, %6, %cst {dimension_numbers = #tpu.dot_dimension_numbers<[1], [0], [0], [1], [0, 0, 1, 1], [], []>} : vector<8x32xbf16>, vector<32x64xbf16>, vector<8x64xf32> -> vector<8x64xf32>
    %c0_7 = arith.constant 0 : index
    %c0_8 = arith.constant 0 : index
    %8 = vector.load %arg5[%c0_7, %c0_8] : memref<1x64xf32, #tpu.memory_space<vmem>>, vector<1x64xf32>
    %9 = vector.broadcast %8 : vector<1x64xf32> to vector<8x64xf32>
    %10 = arith.addf %7, %9 : vector<8x64xf32>
    %c0_9 = arith.constant 0 : index
    %c0_10 = arith.constant 0 : index
    %11 = vector.load %arg6[%c0_9, %c0_10] : memref<32x128xbf16, #tpu.memory_space<vmem>>, vector<32x128xbf16>
    %cst_11 = arith.constant dense<0.000000e+00> : vector<8x128xf32>
    %12 = tpu.matmul %5, %11, %cst_11 {dimension_numbers = #tpu.dot_dimension_numbers<[1], [0], [0], [1], [0, 0, 1, 1], [], []>} : vector<8x32xbf16>, vector<32x128xbf16>, vector<8x128xf32> -> vector<8x128xf32>
    %c0_12 = arith.constant 0 : index
    %c0_13 = arith.constant 0 : index
    %13 = vector.load %arg7[%c0_12, %c0_13] : memref<1x128xf32, #tpu.memory_space<vmem>>, vector<1x128xf32>
    %14 = vector.broadcast %13 : vector<1x128xf32> to vector<8x128xf32>
    %15 = arith.addf %12, %14 : vector<8x128xf32>
    %16 = vector.extract_strided_slice %15 {offsets = [0, 0], sizes = [8, 64], strides = [1, 1]} : vector<8x128xf32> to vector<8x64xf32>
    %17 = vector.extract_strided_slice %15 {offsets = [0, 64], sizes = [8, 64], strides = [1, 1]} : vector<8x128xf32> to vector<8x64xf32>
    %18 = arith.truncf %10 : vector<8x64xf32> to vector<8x64xbf16>
    %19 = vector.shape_cast %18 : vector<8x64xbf16> to vector<1x8x64xbf16>
    %20 = arith.truncf %16 : vector<8x64xf32> to vector<8x64xbf16>
    %21 = vector.shape_cast %20 : vector<8x64xbf16> to vector<1x8x64xbf16>
    %22 = arith.truncf %17 : vector<8x64xf32> to vector<8x64xbf16>
    %23 = vector.shape_cast %22 : vector<8x64xbf16> to vector<1x8x64xbf16>
    %c0_14 = arith.constant 0 : index
    %c0_15 = arith.constant 0 : index
    %c0_16 = arith.constant 0 : index
    %24 = vector.load %arg3[%c0_14, %c0_15, %c0_16] : memref<1x8x8xbf16, #tpu.memory_space<vmem>>, vector<1x8x8xbf16>
    %25 = vector.shape_cast %24 : vector<1x8x8xbf16> to vector<8x8xbf16>
    %26 = arith.extf %25 : vector<8x8xbf16> to vector<8x8xf32>
    %27 = vector.extract_strided_slice %19 {offsets = [0, 0, 0], sizes = [1, 8, 16], strides = [1, 1, 1]} : vector<1x8x64xbf16> to vector<1x8x16xbf16>
    %28 = vector.shape_cast %27 : vector<1x8x16xbf16> to vector<8x16xbf16>
    %29 = vector.extract_strided_slice %21 {offsets = [0, 0, 0], sizes = [1, 8, 16], strides = [1, 1, 1]} : vector<1x8x64xbf16> to vector<1x8x16xbf16>
    %30 = vector.shape_cast %29 : vector<1x8x16xbf16> to vector<8x16xbf16>
    %31 = vector.extract_strided_slice %23 {offsets = [0, 0, 0], sizes = [1, 8, 16], strides = [1, 1, 1]} : vector<1x8x64xbf16> to vector<1x8x16xbf16>
    %32 = vector.shape_cast %31 : vector<1x8x16xbf16> to vector<8x16xbf16>
    %cst_17 = arith.constant dense<0.000000e+00> : vector<8x8xf32>
    %33 = tpu.matmul %28, %30, %cst_17 {dimension_numbers = #tpu.dot_dimension_numbers<[1], [1], [0], [0], [0, 0, 1, 0], [], []>} : vector<8x16xbf16>, vector<8x16xbf16>, vector<8x8xf32> -> vector<8x8xf32>
    %34 = arith.addf %33, %26 : vector<8x8xf32>
    %cst_18 = arith.constant dense<0xFF800000> : vector<8xf32>
    %35 = vector.multi_reduction <maximumf>, %34, %cst_18 [1] : vector<8x8xf32> to vector<8xf32>
    %36 = vector.shape_cast %35 : vector<8xf32> to vector<8x1xf32>
    %37 = vector.broadcast %36 : vector<8x1xf32> to vector<8x8xf32>
    %38 = arith.subf %34, %37 : vector<8x8xf32>
    %39 = math.exp %38 : vector<8x8xf32>
    %cst_19 = arith.constant dense<0.000000e+00> : vector<8xf32>
    %40 = vector.multi_reduction <add>, %39, %cst_19 [1] : vector<8x8xf32> to vector<8xf32>
    %41 = vector.shape_cast %40 : vector<8xf32> to vector<8x1xf32>
    %42 = tpu.reciprocal %41 {approx = true} : vector<8x1xf32> -> vector<8x1xf32>
    %43 = vector.broadcast %42 : vector<8x1xf32> to vector<8x8xf32>
    %44 = arith.mulf %39, %43 : vector<8x8xf32>
    %45 = arith.truncf %44 : vector<8x8xf32> to vector<8x8xbf16>
    %cst_20 = arith.constant dense<0.000000e+00> : vector<8x16xf32>
    %46 = tpu.matmul %45, %32, %cst_20 {dimension_numbers = #tpu.dot_dimension_numbers<[1], [0], [0], [1], [0, 0, 1, 1], [], []>} : vector<8x8xbf16>, vector<8x16xbf16>, vector<8x16xf32> -> vector<8x16xf32>
    %47 = vector.extract_strided_slice %19 {offsets = [0, 0, 16], sizes = [1, 8, 16], strides = [1, 1, 1]} : vector<1x8x64xbf16> to vector<1x8x16xbf16>
    %48 = vector.shape_cast %47 : vector<1x8x16xbf16> to vector<8x16xbf16>
    %49 = vector.extract_strided_slice %21 {offsets = [0, 0, 16], sizes = [1, 8, 16], strides = [1, 1, 1]} : vector<1x8x64xbf16> to vector<1x8x16xbf16>
    %50 = vector.shape_cast %49 : vector<1x8x16xbf16> to vector<8x16xbf16>
    %51 = vector.extract_strided_slice %23 {offsets = [0, 0, 16], sizes = [1, 8, 16], strides = [1, 1, 1]} : vector<1x8x64xbf16> to vector<1x8x16xbf16>
    %52 = vector.shape_cast %51 : vector<1x8x16xbf16> to vector<8x16xbf16>
    %cst_21 = arith.constant dense<0.000000e+00> : vector<8x8xf32>
    %53 = tpu.matmul %48, %50, %cst_21 {dimension_numbers = #tpu.dot_dimension_numbers<[1], [1], [0], [0], [0, 0, 1, 0], [], []>} : vector<8x16xbf16>, vector<8x16xbf16>, vector<8x8xf32> -> vector<8x8xf32>
    %54 = arith.addf %53, %26 : vector<8x8xf32>
    %cst_22 = arith.constant dense<0xFF800000> : vector<8xf32>
    %55 = vector.multi_reduction <maximumf>, %54, %cst_22 [1] : vector<8x8xf32> to vector<8xf32>
    %56 = vector.shape_cast %55 : vector<8xf32> to vector<8x1xf32>
    %57 = vector.broadcast %56 : vector<8x1xf32> to vector<8x8xf32>
    %58 = arith.subf %54, %57 : vector<8x8xf32>
    %59 = math.exp %58 : vector<8x8xf32>
    %cst_23 = arith.constant dense<0.000000e+00> : vector<8xf32>
    %60 = vector.multi_reduction <add>, %59, %cst_23 [1] : vector<8x8xf32> to vector<8xf32>
    %61 = vector.shape_cast %60 : vector<8xf32> to vector<8x1xf32>
    %62 = tpu.reciprocal %61 {approx = true} : vector<8x1xf32> -> vector<8x1xf32>
    %63 = vector.broadcast %62 : vector<8x1xf32> to vector<8x8xf32>
    %64 = arith.mulf %59, %63 : vector<8x8xf32>
    %65 = arith.truncf %64 : vector<8x8xf32> to vector<8x8xbf16>
    %cst_24 = arith.constant dense<0.000000e+00> : vector<8x16xf32>
    %66 = tpu.matmul %65, %52, %cst_24 {dimension_numbers = #tpu.dot_dimension_numbers<[1], [0], [0], [1], [0, 0, 1, 1], [], []>} : vector<8x8xbf16>, vector<8x16xbf16>, vector<8x16xf32> -> vector<8x16xf32>
    %67 = vector.extract_strided_slice %19 {offsets = [0, 0, 32], sizes = [1, 8, 16], strides = [1, 1, 1]} : vector<1x8x64xbf16> to vector<1x8x16xbf16>
    %68 = vector.shape_cast %67 : vector<1x8x16xbf16> to vector<8x16xbf16>
    %69 = vector.extract_strided_slice %21 {offsets = [0, 0, 32], sizes = [1, 8, 16], strides = [1, 1, 1]} : vector<1x8x64xbf16> to vector<1x8x16xbf16>
    %70 = vector.shape_cast %69 : vector<1x8x16xbf16> to vector<8x16xbf16>
    %71 = vector.extract_strided_slice %23 {offsets = [0, 0, 32], sizes = [1, 8, 16], strides = [1, 1, 1]} : vector<1x8x64xbf16> to vector<1x8x16xbf16>
    %72 = vector.shape_cast %71 : vector<1x8x16xbf16> to vector<8x16xbf16>
    %cst_25 = arith.constant dense<0.000000e+00> : vector<8x8xf32>
    %73 = tpu.matmul %68, %70, %cst_25 {dimension_numbers = #tpu.dot_dimension_numbers<[1], [1], [0], [0], [0, 0, 1, 0], [], []>} : vector<8x16xbf16>, vector<8x16xbf16>, vector<8x8xf32> -> vector<8x8xf32>
    %74 = arith.addf %73, %26 : vector<8x8xf32>
    %cst_26 = arith.constant dense<0xFF800000> : vector<8xf32>
    %75 = vector.multi_reduction <maximumf>, %74, %cst_26 [1] : vector<8x8xf32> to vector<8xf32>
    %76 = vector.shape_cast %75 : vector<8xf32> to vector<8x1xf32>
    %77 = vector.broadcast %76 : vector<8x1xf32> to vector<8x8xf32>
    %78 = arith.subf %74, %77 : vector<8x8xf32>
    %79 = math.exp %78 : vector<8x8xf32>
    %cst_27 = arith.constant dense<0.000000e+00> : vector<8xf32>
    %80 = vector.multi_reduction <add>, %79, %cst_27 [1] : vector<8x8xf32> to vector<8xf32>
    %81 = vector.shape_cast %80 : vector<8xf32> to vector<8x1xf32>
    %82 = tpu.reciprocal %81 {approx = true} : vector<8x1xf32> -> vector<8x1xf32>
    %83 = vector.broadcast %82 : vector<8x1xf32> to vector<8x8xf32>
    %84 = arith.mulf %79, %83 : vector<8x8xf32>
    %85 = arith.truncf %84 : vector<8x8xf32> to vector<8x8xbf16>
    %cst_28 = arith.constant dense<0.000000e+00> : vector<8x16xf32>
    %86 = tpu.matmul %85, %72, %cst_28 {dimension_numbers = #tpu.dot_dimension_numbers<[1], [0], [0], [1], [0, 0, 1, 1], [], []>} : vector<8x8xbf16>, vector<8x16xbf16>, vector<8x16xf32> -> vector<8x16xf32>
    %87 = vector.extract_strided_slice %19 {offsets = [0, 0, 48], sizes = [1, 8, 16], strides = [1, 1, 1]} : vector<1x8x64xbf16> to vector<1x8x16xbf16>
    %88 = vector.shape_cast %87 : vector<1x8x16xbf16> to vector<8x16xbf16>
    %89 = vector.extract_strided_slice %21 {offsets = [0, 0, 48], sizes = [1, 8, 16], strides = [1, 1, 1]} : vector<1x8x64xbf16> to vector<1x8x16xbf16>
    %90 = vector.shape_cast %89 : vector<1x8x16xbf16> to vector<8x16xbf16>
    %91 = vector.extract_strided_slice %23 {offsets = [0, 0, 48], sizes = [1, 8, 16], strides = [1, 1, 1]} : vector<1x8x64xbf16> to vector<1x8x16xbf16>
    %92 = vector.shape_cast %91 : vector<1x8x16xbf16> to vector<8x16xbf16>
    %cst_29 = arith.constant dense<0.000000e+00> : vector<8x8xf32>
    %93 = tpu.matmul %88, %90, %cst_29 {dimension_numbers = #tpu.dot_dimension_numbers<[1], [1], [0], [0], [0, 0, 1, 0], [], []>} : vector<8x16xbf16>, vector<8x16xbf16>, vector<8x8xf32> -> vector<8x8xf32>
    %94 = arith.addf %93, %26 : vector<8x8xf32>
    %cst_30 = arith.constant dense<0xFF800000> : vector<8xf32>
    %95 = vector.multi_reduction <maximumf>, %94, %cst_30 [1] : vector<8x8xf32> to vector<8xf32>
    %96 = vector.shape_cast %95 : vector<8xf32> to vector<8x1xf32>
    %97 = vector.broadcast %96 : vector<8x1xf32> to vector<8x8xf32>
    %98 = arith.subf %94, %97 : vector<8x8xf32>
    %99 = math.exp %98 : vector<8x8xf32>
    %cst_31 = arith.constant dense<0.000000e+00> : vector<8xf32>
    %100 = vector.multi_reduction <add>, %99, %cst_31 [1] : vector<8x8xf32> to vector<8xf32>
    %101 = vector.shape_cast %100 : vector<8xf32> to vector<8x1xf32>
    %102 = tpu.reciprocal %101 {approx = true} : vector<8x1xf32> -> vector<8x1xf32>
    %103 = vector.broadcast %102 : vector<8x1xf32> to vector<8x8xf32>
    %104 = arith.mulf %99, %103 : vector<8x8xf32>
    %105 = arith.truncf %104 : vector<8x8xf32> to vector<8x8xbf16>
    %cst_32 = arith.constant dense<0.000000e+00> : vector<8x16xf32>
    %106 = tpu.matmul %105, %92, %cst_32 {dimension_numbers = #tpu.dot_dimension_numbers<[1], [0], [0], [1], [0, 0, 1, 1], [], []>} : vector<8x8xbf16>, vector<8x16xbf16>, vector<8x16xf32> -> vector<8x16xf32>
    %107 = tpu.concatenate %46, %66, %86, %106 in 1 : vector<8x16xf32>, vector<8x16xf32>, vector<8x16xf32>, vector<8x16xf32> -> vector<8x64xf32>
    %c0_33 = arith.constant 0 : index
    %c0_34 = arith.constant 0 : index
    %c0_35 = arith.constant 0 : index
    %108 = vector.load %arg8[%c0_33, %c0_34, %c0_35] : memref<1x8x64xf32, #tpu.memory_space<vmem>>, vector<1x8x64xf32>
    %109 = vector.shape_cast %108 : vector<1x8x64xf32> to vector<8x64xf32>
    %110 = vector.shape_cast %107 : vector<8x64xf32> to vector<1x8x64xf32>
    tpu.vector_store %arg8[%c0_33, %c0_34, %c0_35], %110 {strides = array<i32>} : memref<1x8x64xf32, #tpu.memory_space<vmem>>, vector<1x8x64xf32>,
    return
  }
  func.func @transform_0(%arg0: i32) -> (i32, i32, i32) {
    %c0_i32 = arith.constant 0 : i32
    %c0_i32_0 = arith.constant 0 : i32
    %c0_i32_1 = arith.constant 0 : i32
    return %arg0, %c0_i32, %c0_i32_0 : i32, i32, i32
  }
  func.func @transform_1(%arg0: i32) -> (i32, i32, i32) {
    %c0_i32 = arith.constant 0 : i32
    %c0_i32_0 = arith.constant 0 : i32
    %c0_i32_1 = arith.constant 0 : i32
    return %arg0, %c0_i32, %c0_i32_0 : i32, i32, i32
  }
  func.func @transform_2(%arg0: i32) -> (i32, i32, i32) {
    %c0_i32 = arith.constant 0 : i32
    %c0_i32_0 = arith.constant 0 : i32
    %c0_i32_1 = arith.constant 0 : i32
    return %arg0, %c0_i32, %c0_i32_0 : i32, i32, i32
  }
  func.func @transform_3(%arg0: i32) -> (i32, i32) {
    %c0_i32 = arith.constant 0 : i32
    %c0_i32_0 = arith.constant 0 : i32
    %c0_i32_1 = arith.constant 0 : i32
    return %c0_i32, %c0_i32_0 : i32, i32
  }
  func.func @transform_4(%arg0: i32) -> (i32, i32) {
    %c0_i32 = arith.constant 0 : i32
    %c0_i32_0 = arith.constant 0 : i32
    %c0_i32_1 = arith.constant 0 : i32
    return %c0_i32, %c0_i32_0 : i32, i32
  }
  func.func @transform_5(%arg0: i32) -> (i32, i32) {
    %c0_i32 = arith.constant 0 : i32
    %c0_i32_0 = arith.constant 0 : i32
    %c0_i32_1 = arith.constant 0 : i32
    return %c0_i32, %c0_i32_0 : i32, i32
  }
  func.func @transform_6(%arg0: i32) -> (i32, i32) {
    %c0_i32 = arith.constant 0 : i32
    %c0_i32_0 = arith.constant 0 : i32
    %c0_i32_1 = arith.constant 0 : i32
    return %c0_i32, %c0_i32_0 : i32, i32
  }
  func.func @transform_7(%arg0: i32) -> (i32, i32, i32) {
    %c0_i32 = arith.constant 0 : i32
    %c0_i32_0 = arith.constant 0 : i32
    %c0_i32_1 = arith.constant 0 : i32
    return %arg0, %c0_i32, %c0_i32_0 : i32, i32, i32
  }
}

</mosaic_0001>

<llo_original>
// kernel: tpu_custom_call.1
$region0: #{tpu_custom_call.1}
  #allocation0 [shape = 'u32[]', space=smem, size = 0x4, offset = 0x4, fixed_abs, tag = 'smem constant byte address 0x4 - core index']
  #allocation1 [shape = 'u32[144,128]{1,0:T(1,128)}', space=vmem, size = 0x12000, scoped, tag = 'internal scratch']
  %s0 = inlined_call_operand.hbm [shape: f32[2,8,32], index: 0, kind: input, shape index: {}]
  %s1 = inlined_call_operand.hbm [shape: f32[2,8,32], index: 1, kind: input, shape index: {}]
  %s2 = inlined_call_operand.hbm [shape: bf16[2,8,8], index: 2, kind: input, shape index: {}]
  %s3 = inlined_call_operand.hbm [shape: bf16[32,64], index: 3, kind: input, shape index: {}]
  %s4 = inlined_call_operand.vmem [shape: f32[1,64], index: 4, kind: input, shape index: {}]
  %s5 = inlined_call_operand.vmem [shape: bf16[32,128], index: 5, kind: input, shape index: {}]
  %s6 = inlined_call_operand.vmem [shape: f32[1,128], index: 6, kind: input, shape index: {}]
  %s7 = inlined_call_operand.hbm [shape: f32[2,8,64], index: 7, kind: output, shape index: {}]
  %s8 = sld [smem:[#allocation0]]
  $region77: #{tpu_custom_call.1} parent=0
    _
  %s10 = ssub.s32 1, %s8
  %s11 = scalar_select 0, %s10, %s8
  $region1: #{tpu_custom_call.1} parent=0
    #allocation2 [shape = 'u8[8192]{0}', space=vmem, size = 0x2000, scoped, tag = 'input window, operand 0']
    #allocation3 [shape = 's32[2]{0}', space=sflag, size = 0x8, scoped, tag = 'scoped memory for tpu_custom_call.1']
    #allocation4 [shape = 's32[2]{0}', space=sflag, size = 0x8, scoped, tag = 'scoped memory for tpu_custom_call.1']
    #allocation5 [shape = 'u8[8192]{0}', space=vmem, size = 0x2000, scoped, tag = 'input window, operand 1']
    #allocation6 [shape = 's32[2]{0}', space=sflag, size = 0x8, scoped, tag = 'scoped memory for tpu_custom_call.1']
    #allocation7 [shape = 'u8[4096]{0}', space=vmem, size = 0x1000, scoped, tag = 'input window, operand 2']
    #allocation8 [shape = 'u8[8192]{0}', space=vmem, size = 0x2000, scoped, tag = 'input window, operand 3, single buffered']
    #allocation9 [shape = 's32[1]{0}', space=sflag, size = 0x4, scoped, tag = 'scoped memory for tpu_custom_call.1']
    #allocation10 [shape = 'u8[8192]{0}', space=vmem, size = 0x2000, scoped, tag = 'output window, operand 0']
    %12 = vsyncpa [#allocation3], 0
    %s13 = scalar_lea.sflag [#allocation3], 1
    %14 = vsyncpa %s13, 0
    %15 = vsyncpa [#allocation6], 0
    %s16 = scalar_lea.sflag [#allocation6], 1
    %17 = vsyncpa %s16, 0
    %18 = vsyncpa [#allocation9], 0
    %19 = vsyncpa [#allocation4], 0
    %s20 = scalar_lea.sflag [#allocation4], 1
    %21 = vsyncpa %s20, 0
    loop: start=0, step=1, limit=4
    $region2: #{tpu_custom_call.1} parent=1 // loop_pre_header
      _
    $region3: #{tpu_custom_call.1} parent=1 // loop_header
      %s23 = sphi 0, %s27
      %p24 = scmp.ge.s32.totalorder %s23, 4
      %s33 = sphi 0, %s35
      %s36 = sphi 0, %s33
      %s37 = sphi 0, %s36
      %s53 = sphi 0, %s37
      %s59 = sphi 0, %s61
      %s62 = sphi 0, %s59
      %s63 = sphi 0, %s62
      %s79 = sphi 0, %s63
      %s85 = sphi 0, %s87
      %s88 = sphi 0, %s85
      %s89 = sphi 0, %s88
      %s105 = sphi 0, %s89
      %s109 = sphi 0, %s109
      %s111 = sphi 0, %s109
      %s112 = sphi 0, %s111
      %s126 = sphi 0, %s112
      %s130 = sphi 0, %s130
      %s132 = sphi 0, %s130
      %s133 = sphi 0, %s132
      %s147 = sphi 0, %s133
      %s151 = sphi 0, %s151
      %s153 = sphi 0, %s151
      %s154 = sphi 0, %s153
      %s168 = sphi 0, %s154
      %s172 = sphi 0, %s172
      %s174 = sphi 0, %s172
      %s175 = sphi 0, %s174
      %s189 = sphi 0, %s175
      %s195 = sphi 0, %s197
      %s198 = sphi 0, %s195
      %s199 = sphi 0, %s198
      %s215 = sphi 0, %s199
    $region4: #{tpu_custom_call.1} parent=1 // loop_header_branch
      %26 = sbr.rel (%p24) target = $region8
    $region5: #{tpu_custom_call.1} parent=1 // loop_body
      %s28 = ssub.s32 %s23, 1
      %s29 = ssub.s32 %s23, 2
      %s30 = sadd.s32 %s23, 1
      %s31 = ssub.s32 %s23, %s30
      %p32 = scmp.eq.s32.totalorder %s31, 0
      %s34 = sadd.s32 %s33, 1
      %s35 = scalar_select %p32, %s33, %s34
      %p38 = pneg %p32
      %p39 = scmp.eq.s32.totalorder %s23, 1
      %p40 = por %p38, %p39
      %p41 = scmp.ne.s32.totalorder %s33, %s36
      %p42 = scmp.eq.s32.totalorder %s23, 0
      %p43 = por %p41, %p42
      %p44 = scmp.ne.s32.totalorder %s33, %s36
      %p45 = scmp.eq.s32.totalorder %s28, 1
      %p46 = por %p44, %p45
      %p47 = scmp.ne.s32.totalorder %s36, %s37
      %p48 = scmp.eq.s32.totalorder %s28, 0
      %p49 = por %p47, %p48
      %p50 = scmp.ne.s32.totalorder %s36, %s37
      %p51 = scmp.eq.s32.totalorder %s29, 1
      %p52 = por %p50, %p51
      %p54 = scmp.ne.s32.totalorder %s37, %s53
      %p55 = scmp.eq.s32.totalorder %s29, 0
      %p56 = por %p54, %p55
      %s57 = ssub.s32 %s23, %s30
      %p58 = scmp.eq.s32.totalorder %s57, 0
      %s60 = sadd.s32 %s59, 1
      %s61 = scalar_select %p58, %s59, %s60
      %p64 = pneg %p58
      %p65 = scmp.eq.s32.totalorder %s23, 1
      %p66 = por %p64, %p65
      %p67 = scmp.ne.s32.totalorder %s59, %s62
      %p68 = scmp.eq.s32.totalorder %s23, 0
      %p69 = por %p67, %p68
      %p70 = scmp.ne.s32.totalorder %s59, %s62
      %p71 = scmp.eq.s32.totalorder %s28, 1
      %p72 = por %p70, %p71
      %p73 = scmp.ne.s32.totalorder %s62, %s63
      %p74 = scmp.eq.s32.totalorder %s28, 0
      %p75 = por %p73, %p74
      %p76 = scmp.ne.s32.totalorder %s62, %s63
      %p77 = scmp.eq.s32.totalorder %s29, 1
      %p78 = por %p76, %p77
      %p80 = scmp.ne.s32.totalorder %s63, %s79
      %p81 = scmp.eq.s32.totalorder %s29, 0
      %p82 = por %p80, %p81
      %s83 = ssub.s32 %s23, %s30
      %p84 = scmp.eq.s32.totalorder %s83, 0
      %s86 = sadd.s32 %s85, 1
      %s87 = scalar_select %p84, %s85, %s86
      %p90 = pneg %p84
      %p91 = scmp.eq.s32.totalorder %s23, 1
      %p92 = por %p90, %p91
      %p93 = scmp.ne.s32.totalorder %s85, %s88
      %p94 = scmp.eq.s32.totalorder %s23, 0
      %p95 = por %p93, %p94
      %p96 = scmp.ne.s32.totalorder %s85, %s88
      %p97 = scmp.eq.s32.totalorder %s28, 1
      %p98 = por %p96, %p97
      %p99 = scmp.ne.s32.totalorder %s88, %s89
      %p100 = scmp.eq.s32.totalorder %s28, 0
      %p101 = por %p99, %p100
      %p102 = scmp.ne.s32.totalorder %s88, %s89
      %p103 = scmp.eq.s32.totalorder %s29, 1
      %p104 = por %p102, %p103
      %p106 = scmp.ne.s32.totalorder %s89, %s105
      %p107 = scmp.eq.s32.totalorder %s29, 0
      %p108 = por %p106, %p107
      %s110 = sadd.s32 %s109, 1
      %p113 = scmp.eq.s32.totalorder %s23, 1
      %p114 = scmp.ne.s32.totalorder %s109, %s111
      %p115 = scmp.eq.s32.totalorder %s23, 0
      %p116 = por %p114, %p115
      %p117 = scmp.ne.s32.totalorder %s109, %s111
      %p118 = scmp.eq.s32.totalorder %s28, 1
      %p119 = por %p117, %p118
      %p120 = scmp.ne.s32.totalorder %s111, %s112
      %p121 = scmp.eq.s32.totalorder %s28, 0
      %p122 = por %p120, %p121
      %p123 = scmp.ne.s32.totalorder %s111, %s112
      %p124 = scmp.eq.s32.totalorder %s29, 1
      %p125 = por %p123, %p124
      %p127 = scmp.ne.s32.totalorder %s112, %s126
      %p128 = scmp.eq.s32.totalorder %s29, 0
      %p129 = por %p127, %p128
      %s131 = sadd.s32 %s130, 1
      %p134 = scmp.eq.s32.totalorder %s23, 1
      %p135 = scmp.ne.s32.totalorder %s130, %s132
      %p136 = scmp.eq.s32.totalorder %s23, 0
      %p137 = por %p135, %p136
      %p138 = scmp.ne.s32.totalorder %s130, %s132
      %p139 = scmp.eq.s32.totalorder %s28, 1
      %p140 = por %p138, %p139
      %p141 = scmp.ne.s32.totalorder %s132, %s133
      %p142 = scmp.eq.s32.totalorder %s28, 0
      %p143 = por %p141, %p142
      %p144 = scmp.ne.s32.totalorder %s132, %s133
      %p145 = scmp.eq.s32.totalorder %s29, 1
      %p146 = por %p144, %p145
      %p148 = scmp.ne.s32.totalorder %s133, %s147
      %p149 = scmp.eq.s32.totalorder %s29, 0
      %p150 = por %p148, %p149
      %s152 = sadd.s32 %s151, 1
      %p155 = scmp.eq.s32.totalorder %s23, 1
      %p156 = scmp.ne.s32.totalorder %s151, %s153
      %p157 = scmp.eq.s32.totalorder %s23, 0
      %p158 = por %p156, %p157
      %p159 = scmp.ne.s32.totalorder %s151, %s153
      %p160 = scmp.eq.s32.totalorder %s28, 1
      %p161 = por %p159, %p160
      %p162 = scmp.ne.s32.totalorder %s153, %s154
      %p163 = scmp.eq.s32.totalorder %s28, 0
      %p164 = por %p162, %p163
      %p165 = scmp.ne.s32.totalorder %s153, %s154
      %p166 = scmp.eq.s32.totalorder %s29, 1
      %p167 = por %p165, %p166
      %p169 = scmp.ne.s32.totalorder %s154, %s168
      %p170 = scmp.eq.s32.totalorder %s29, 0
      %p171 = por %p169, %p170
      %s173 = sadd.s32 %s172, 1
      %p176 = scmp.eq.s32.totalorder %s23, 1
      %p177 = scmp.ne.s32.totalorder %s172, %s174
      %p178 = scmp.eq.s32.totalorder %s23, 0
      %p179 = por %p177, %p178
      %p180 = scmp.ne.s32.totalorder %s172, %s174
      %p181 = scmp.eq.s32.totalorder %s28, 1
      %p182 = por %p180, %p181
      %p183 = scmp.ne.s32.totalorder %s174, %s175
      %p184 = scmp.eq.s32.totalorder %s28, 0
      %p185 = por %p183, %p184
      %p186 = scmp.ne.s32.totalorder %s174, %s175
      %p187 = scmp.eq.s32.totalorder %s29, 1
      %p188 = por %p186, %p187
      %p190 = scmp.ne.s32.totalorder %s175, %s189
      %p191 = scmp.eq.s32.totalorder %s29, 0
      %p192 = por %p190, %p191
      %s193 = ssub.s32 %s23, %s30
      %p194 = scmp.eq.s32.totalorder %s193, 0
      %s196 = sadd.s32 %s195, 1
      %s197 = scalar_select %p194, %s195, %s196
      %p200 = pneg %p194
      %p201 = scmp.eq.s32.totalorder %s23, 1
      %p202 = por %p200, %p201
      %p203 = scmp.ne.s32.totalorder %s195, %s198
      %p204 = scmp.eq.s32.totalorder %s23, 0
      %p205 = por %p203, %p204
      %p206 = scmp.ne.s32.totalorder %s195, %s198
      %p207 = scmp.eq.s32.totalorder %s28, 1
      %p208 = por %p206, %p207
      %p209 = scmp.ne.s32.totalorder %s198, %s199
      %p210 = scmp.eq.s32.totalorder %s28, 0
      %p211 = por %p209, %p210
      %p212 = scmp.ne.s32.totalorder %s198, %s199
      %p213 = scmp.eq.s32.totalorder %s29, 1
      %p214 = por %p212, %p213
      %p216 = scmp.ne.s32.totalorder %s199, %s215
      %p217 = scmp.eq.s32.totalorder %s29, 0
      %p218 = por %p216, %p217
      %p219 = scmp.le.s32.totalorder 1, %s23
      %p220 = scmp.lt.s32.totalorder %s23, 3
      %p221 = pnand %p219, %p220
      %p222 = pneg %p221
      // Predicated region
      $region9: #{tpu_custom_call.1} parent=5 // pred_check
        _
      $region10: #{tpu_custom_call.1} parent=5 // pred_check_branch
        %224 = sbr.rel (%p221) target = $region12
      $region11: #{tpu_custom_call.1} parent=5 // pred_region
        %s225 = ssub.s32 %s23, 1
        // Predicated region
        $region13: #{tpu_custom_call.1} parent=11 // pred_check
          %p226 = pneg %p122
        $region14: #{tpu_custom_call.1} parent=11 // pred_check_branch
          %228 = sbr.rel (%p226) target = $region16
        $region15: #{tpu_custom_call.1} parent=11 // pred_region
          %s230 = ssub.s32 256, 256
          %231 = vsyncadd [#allocation9], %s230
          %s232 = sshll.u32 [#allocation8], 4
          %s233 = int_to_ptr.vmem [resolvable:$true] %s232
          %238 = dma.hbm_to_vmem [thread:$0]  %s3, 256, %s233, [#allocation9], 64, 64, 4
        $region16: #{tpu_custom_call.1} parent=11 // pred_fallthru
          _
        // Predicated region
        $region17: #{tpu_custom_call.1} parent=11 // pred_check
          %p239 = pneg %p143
        $region18: #{tpu_custom_call.1} parent=11 // pred_check_branch
          %241 = sbr.rel (%p239) target = $region20
        $region19: #{tpu_custom_call.1} parent=11 // pred_region
          _
        $region20: #{tpu_custom_call.1} parent=11 // pred_fallthru
          _
        // Predicated region
        $region21: #{tpu_custom_call.1} parent=11 // pred_check
          %p242 = pneg %p164
        $region22: #{tpu_custom_call.1} parent=11 // pred_check_branch
          %244 = sbr.rel (%p242) target = $region24
        $region23: #{tpu_custom_call.1} parent=11 // pred_region
          _
        $region24: #{tpu_custom_call.1} parent=11 // pred_fallthru
          _
        // Predicated region
        $region25: #{tpu_custom_call.1} parent=11 // pred_check
          %p245 = pneg %p185
        $region26: #{tpu_custom_call.1} parent=11 // pred_check_branch
          %247 = sbr.rel (%p245) target = $region28
        $region27: #{tpu_custom_call.1} parent=11 // pred_region
          _
        $region28: #{tpu_custom_call.1} parent=11 // pred_fallthru
          _
      $region12: #{tpu_custom_call.1} parent=5 // pred_fallthru
        _
      %p248 = scmp.lt.s32.totalorder %s23, 2
      // Predicated region
      $region29: #{tpu_custom_call.1} parent=5 // pred_check
        %p249 = pneg %p248
      $region30: #{tpu_custom_call.1} parent=5 // pred_check_branch
        %251 = sbr.rel (%p249) target = $region32
      $region31: #{tpu_custom_call.1} parent=5 // pred_region
        // Predicated region
        $region33: #{tpu_custom_call.1} parent=31 // pred_check
          %p252 = pneg %p43
        $region34: #{tpu_custom_call.1} parent=31 // pred_check_branch
          %254 = sbr.rel (%p252) target = $region36
        $region35: #{tpu_custom_call.1} parent=31 // pred_region
          %s255 = sand.u32 %s33, 1
          %s256 = scalar_lea.sflag [#allocation3], %s255
          %s257 = sand.u32 %s33, 1
          %s258 = smul.addr %s257, 8
          %s259 = scalar_lea.vmem [#allocation2], %s258
          %s261 = ssub.s32 128, 128
          %262 = vsyncadd %s256, %s261
          %s263 = smul.addr %s23, 128
          %s264 = scalar_lea.hbm %s0, %s263
          %s266 = sshll.u32 %s259, 4
          %s267 = int_to_ptr.vmem [resolvable:$true] %s266
          %269 = dma.hbm_to_vmem [thread:$0]  %s264, 128, %s267, %s256
        $region36: #{tpu_custom_call.1} parent=31 // pred_fallthru
          _
        // Predicated region
        $region37: #{tpu_custom_call.1} parent=31 // pred_check
          %p270 = pneg %p69
        $region38: #{tpu_custom_call.1} parent=31 // pred_check_branch
          %272 = sbr.rel (%p270) target = $region40
        $region39: #{tpu_custom_call.1} parent=31 // pred_region
          %s273 = sand.u32 %s23, 1
          %s274 = scalar_lea.sflag [#allocation6], %s273
          %s275 = sand.u32 %s59, 1
          %s276 = smul.addr %s275, 8
          %s277 = scalar_lea.vmem [#allocation5], %s276
          %s279 = ssub.s32 128, 128
          %280 = vsyncadd %s274, %s279
          %s281 = smul.addr %s23, 128
          %s282 = scalar_lea.hbm %s1, %s281
          %s284 = sshll.u32 %s277, 4
          %s285 = int_to_ptr.vmem [resolvable:$true] %s284
          %287 = dma.hbm_to_vmem [thread:$0]  %s282, 128, %s285, %s274
        $region40: #{tpu_custom_call.1} parent=31 // pred_fallthru
          _
        // Predicated region
        $region41: #{tpu_custom_call.1} parent=31 // pred_check
          %p288 = pneg %p95
        $region42: #{tpu_custom_call.1} parent=31 // pred_check_branch
          %290 = sbr.rel (%p288) target = $region44
        $region43: #{tpu_custom_call.1} parent=31 // pred_region
          %s291 = sand.u32 %s23, 1
          %s292 = scalar_lea.sflag [#allocation6], %s291
          %s293 = sand.u32 %s85, 1
          %s294 = smul.addr %s293, 4
          %s295 = scalar_lea.vmem [#allocation7], %s294
          %s297 = ssub.s32 64, 64
          %298 = vsyncadd %s292, %s297
          %s299 = smul.addr %s23, 64
          %s300 = scalar_lea.hbm %s2, %s299
          %s302 = sshll.u32 %s295, 4
          %s303 = int_to_ptr.vmem [resolvable:$true] %s302
          %305 = dma.hbm_to_vmem [thread:$0]  %s300, 64, %s303, %s292
        $region44: #{tpu_custom_call.1} parent=31 // pred_fallthru
          _
      $region32: #{tpu_custom_call.1} parent=5 // pred_fallthru
        _
      %p306 = scmp.le.s32.totalorder 1, %s23
      %p307 = scmp.lt.s32.totalorder %s23, 3
      %p308 = pnand %p306, %p307
      %p309 = pneg %p308
      // Predicated region
      $region45: #{tpu_custom_call.1} parent=5 // pred_check
        _
      $region46: #{tpu_custom_call.1} parent=5 // pred_check_branch
        %311 = sbr.rel (%p308) target = $region48
      $region47: #{tpu_custom_call.1} parent=5 // pred_region
        %s312 = ssub.s32 %s23, 1
        %s313 = sand.u32 %s36, 1
        %s314 = scalar_lea.sflag [#allocation3], %s313
        %s315 = sand.u32 %s36, 1
        %s316 = smul.addr %s315, 8
        %s317 = scalar_lea.vmem [#allocation2], %s316
        // Predicated region
        $region49: #{tpu_custom_call.1} parent=47 // pred_check
          %p318 = pneg %p49
        $region50: #{tpu_custom_call.1} parent=47 // pred_check_branch
          %320 = sbr.rel (%p318) target = $region52
        $region51: #{tpu_custom_call.1} parent=47 // pred_region
          %321 = dma.done %s314, 128
        $region52: #{tpu_custom_call.1} parent=47 // pred_fallthru
          _
        %s322 = sand.u32 %s28, 1
        %s323 = scalar_lea.sflag [#allocation6], %s322
        %s324 = sand.u32 %s62, 1
        %s325 = smul.addr %s324, 8
        %s326 = scalar_lea.vmem [#allocation5], %s325
        // Predicated region
        $region53: #{tpu_custom_call.1} parent=47 // pred_check
          %p327 = pneg %p75
        $region54: #{tpu_custom_call.1} parent=47 // pred_check_branch
          %329 = sbr.rel (%p327) target = $region56
        $region55: #{tpu_custom_call.1} parent=47 // pred_region
          %330 = dma.done %s323, 128
        $region56: #{tpu_custom_call.1} parent=47 // pred_fallthru
          _
        %s331 = sand.u32 %s28, 1
        %s332 = scalar_lea.sflag [#allocation6], %s331
        %s333 = sand.u32 %s88, 1
        %s334 = smul.addr %s333, 4
        %s335 = scalar_lea.vmem [#allocation7], %s334
        // Predicated region
        $region57: #{tpu_custom_call.1} parent=47 // pred_check
          %p336 = pneg %p101
        $region58: #{tpu_custom_call.1} parent=47 // pred_check_branch
          %338 = sbr.rel (%p336) target = $region60
        $region59: #{tpu_custom_call.1} parent=47 // pred_region
          %339 = dma.done %s332, 64
        $region60: #{tpu_custom_call.1} parent=47 // pred_fallthru
          _
        // Predicated region
        $region61: #{tpu_custom_call.1} parent=47 // pred_check
          %p340 = pneg %p122
        $region62: #{tpu_custom_call.1} parent=47 // pred_check_branch
          %342 = sbr.rel (%p340) target = $region64
        $region63: #{tpu_custom_call.1} parent=47 // pred_region
          %343 = dma.done [#allocation9], 256
        $region64: #{tpu_custom_call.1} parent=47 // pred_fallthru
          _
        %s344 = sand.u32 %s36, 1
        %s345 = scalar_lea.sflag [#allocation3], %s344
        %s346 = sand.u32 %s36, 1
        %s347 = smul.addr %s346, 8
        %s348 = scalar_lea.vmem [#allocation2], %s347
        %p349 = pneg %p49
        %p350 = pneg %p46
        %s351 = sand.u32 %s28, 1
        %s352 = scalar_lea.sflag [#allocation6], %s351
        %s353 = sand.u32 %s62, 1
        %s354 = smul.addr %s353, 8
        %s355 = scalar_lea.vmem [#allocation5], %s354
        %p356 = pneg %p75
        %p357 = pneg %p72
        %s358 = sand.u32 %s28, 1
        %s359 = scalar_lea.sflag [#allocation6], %s358
        %s360 = sand.u32 %s88, 1
        %s361 = smul.addr %s360, 4
        %s362 = scalar_lea.vmem [#allocation7], %s361
        %p363 = pneg %p101
        %p364 = pneg %p98
        %p365 = pneg %p122
        %p366 = pneg %p119
        %p367 = pneg %p143
        %p368 = pneg %p140
        %p369 = pneg %p164
        %p370 = pneg %p161
        %p371 = pneg %p185
        %p372 = pneg %p182
        %p373 = pneg %p211
        %p374 = pneg %p208
        %s375 = sand.u32 %s198, 1
        %s376 = scalar_lea.sflag [#allocation4], %s375
        %s377 = sand.u32 %s198, 1
        %s378 = smul.addr %s377, 8
        %s379 = scalar_lea.vmem [#allocation10], %s378
        %v381 = vld [vmem:[%s317] sm:$0xff]
        %v382 = vpack.c.bf16 %v381, %v381
        %v383 = vld [vmem:[%s326] sm:$0xff]
        %v384 = vpack.c.bf16 %v383, %v383
        %v385 = vld [vmem:[#allocation8] sm:$0xf]
        %v386 = vld [vmem:[#allocation8 + $0x4] sm:$0xf]
        %v387 = vld [vmem:[#allocation8 + $0x8] sm:$0xf]
        %v388 = vld [vmem:[#allocation8 + $0xc] sm:$0xf]
        %v389 = vld [vmem:[%s4] sm:$0x1]
        %v391 = vlaneseq
        %v392 = vshrl.u32 %v391, 7
        %v393 = vsub.s32 0, %v392
        %v394 = vrot.slane %v389, %v393
        %v400 = vunpack.c.l.b16 %v385
        %v401 = vunpack.c.l.b16 %v386
        %v402 = vunpack.c.l.b16 %v387
        %v403 = vunpack.c.l.b16 %v388
        %v404 = vpack.c.b16 %v401, %v400
        %v405 = vpack.c.b16 %v403, %v402
        %vm408 = vcmask 261120
        %v410 = vsel %vm408, %v382, 0
        %412 = vmatprep.subr.bf16.mxu0 0
        %413 = vmatpush1.bf16.msra.mxu0 %v404
        %414 = vmatprep.subr.bf16.mxu0 0
        %415 = vmatpush1.bf16.msra.mxu0 %v405
        %416 = vmatprep.subr.bf16.mxu0 0
        %417 = vmatpush1.bf16.msra.mxu0 0
        %418 = vmatprep.subr.bf16.mxu0 0
        %419 = vmatpush1.bf16.msra.mxu0 0
        %420 = vmatprep.subr.bf16.mxu0 0
        %421 = vmatpush1.bf16.msra.mxu0 0
        %422 = vmatprep.subr.bf16.mxu0 0
        %423 = vmatpush1.bf16.msra.mxu0 0
        %424 = vmatprep.subr.bf16.mxu0 0
        %425 = vmatpush1.bf16.msra.mxu0 0
        %426 = vmatprep.subr.bf16.mxu0 0
        %427 = vmatpush1.bf16.msra.mxu0 0
        %428 = vmatprep.subr.bf16.mxu0 0
        %429 = vmatpush1.bf16.msra.mxu0 0
        %430 = vmatprep.subr.bf16.mxu0 0
        %431 = vmatpush1.bf16.msra.mxu0 0
        %432 = vmatprep.subr.bf16.mxu0 0
        %433 = vmatpush1.bf16.msra.mxu0 0
        %434 = vmatprep.subr.bf16.mxu0 0
        %435 = vmatpush1.bf16.msra.mxu0 0
        %436 = vmatprep.subr.bf16.mxu0 0
        %437 = vmatpush1.bf16.msra.mxu0 0
        %438 = vmatprep.subr.bf16.mxu0 0
        %439 = vmatpush1.bf16.msra.mxu0 0
        %440 = vmatprep.subr.bf16.mxu0 0
        %441 = vmatpush1.bf16.msra.mxu0 0
        %442 = vmatprep.subr.bf16.mxu0 0
        %443 = vmatpush1.bf16.msra.mxu0 0
        %444 = vmatprep.mubr.bf16.mxu0 0
        %445 = vmatmul.mubr.bf16.gmra.mrb[0].mxu0 %v410
        %v446 = vpop.f32.mrb[0].mxu0
        %v447 = vadd.f32 %v394, %v446
        %v448 = vpop.f32.mrb[0].mxu0
        %v449 = vpop.f32.mrb[0].mxu0
        %v450 = vpop.f32.mrb[0].mxu0
        %451 = vdwg.mxu0
        %v452 = vld [vmem:[%s5] sm:$0xf]
        %v453 = vld [vmem:[%s5 + $0x4] sm:$0xf]
        %v454 = vld [vmem:[%s5 + $0x8] sm:$0xf]
        %v455 = vld [vmem:[%s5 + $0xc] sm:$0xf]
        %v456 = vld [vmem:[%s6] sm:$0x1]
        %v458 = vlaneseq
        %v459 = vshrl.u32 %v458, 7
        %v460 = vsub.s32 0, %v459
        %v461 = vrot.slane %v456, %v460
        %v467 = vunpack.c.l.b16 %v452
        %v468 = vunpack.c.l.b16 %v453
        %v469 = vunpack.c.l.b16 %v454
        %v470 = vunpack.c.l.b16 %v455
        %v471 = vpack.c.b16 %v468, %v467
        %v472 = vpack.c.b16 %v470, %v469
        %v476 = vsel %vm408, %v384, 0
        %478 = vmatprep.subr.bf16.mxu0 0
        %479 = vmatpush1.bf16.msra.mxu0 %v471
        %480 = vmatprep.subr.bf16.mxu0 0
        %481 = vmatpush1.bf16.msra.mxu0 %v472
        %482 = vmatprep.subr.bf16.mxu0 0
        %483 = vmatpush1.bf16.msra.mxu0 0
        %484 = vmatprep.subr.bf16.mxu0 0
        %485 = vmatpush1.bf16.msra.mxu0 0
        %486 = vmatprep.subr.bf16.mxu0 0
        %487 = vmatpush1.bf16.msra.mxu0 0
        %488 = vmatprep.subr.bf16.mxu0 0
        %489 = vmatpush1.bf16.msra.mxu0 0
        %490 = vmatprep.subr.bf16.mxu0 0
        %491 = vmatpush1.bf16.msra.mxu0 0
        %492 = vmatprep.subr.bf16.mxu0 0
        %493 = vmatpush1.bf16.msra.mxu0 0
        %494 = vmatprep.subr.bf16.mxu0 0
        %495 = vmatpush1.bf16.msra.mxu0 0
        %496 = vmatprep.subr.bf16.mxu0 0
        %497 = vmatpush1.bf16.msra.mxu0 0
        %498 = vmatprep.subr.bf16.mxu0 0
        %499 = vmatpush1.bf16.msra.mxu0 0
        %500 = vmatprep.subr.bf16.mxu0 0
        %501 = vmatpush1.bf16.msra.mxu0 0
        %502 = vmatprep.subr.bf16.mxu0 0
        %503 = vmatpush1.bf16.msra.mxu0 0
        %504 = vmatprep.subr.bf16.mxu0 0
        %505 = vmatpush1.bf16.msra.mxu0 0
        %506 = vmatprep.subr.bf16.mxu0 0
        %507 = vmatpush1.bf16.msra.mxu0 0
        %508 = vmatprep.subr.bf16.mxu0 0
        %509 = vmatpush1.bf16.msra.mxu0 0
        %510 = vmatprep.mubr.bf16.mxu0 0
        %511 = vmatmul.mubr.bf16.gmra.mrb[0].mxu0 %v476
        %v512 = vpop.f32.mrb[0].mxu0
        %v513 = vadd.f32 %v461, %v512
        %v514 = vpop.f32.mrb[0].mxu0
        %v515 = vpop.f32.mrb[0].mxu0
        %v516 = vpop.f32.mrb[0].mxu0
        %517 = vdwg.mxu0
        %v518 = vpack.c.bf16 %v447, %v447
        %v519 = vpack.c.bf16 %v513, %v513
        %v520 = vld [vmem:[%s335] sm:$0xf]
        %v521 = vunpack.c.l.bf16 %v520
        %vm522 = vcmask 130048
        %v524 = vsel %vm522, %v518, 0
        %v527 = vsel %vm522, %v519, 0
        %529 = vmatprep.subr.bf16.mxu0 0
        %530 = vmatpush1.bf16.xpose.msra.mxu0 %v527
        %531 = vmatprep.subr.bf16.mxu0 0
        %532 = vmatpush1.bf16.xpose.msra.mxu0 0
        %533 = vmatprep.subr.bf16.mxu0 0
        %534 = vmatpush1.bf16.xpose.msra.mxu0 0
        %535 = vmatprep.subr.bf16.mxu0 0
        %536 = vmatpush1.bf16.xpose.msra.mxu0 0
        %537 = vmatprep.subr.bf16.mxu0 0
        %538 = vmatpush1.bf16.xpose.msra.mxu0 0
        %539 = vmatprep.subr.bf16.mxu0 0
        %540 = vmatpush1.bf16.xpose.msra.mxu0 0
        %541 = vmatprep.subr.bf16.mxu0 0
        %542 = vmatpush1.bf16.xpose.msra.mxu0 0
        %543 = vmatprep.subr.bf16.mxu0 0
        %544 = vmatpush1.bf16.xpose.msra.mxu0 0
        %545 = vmatprep.subr.bf16.mxu0 0
        %546 = vmatpush1.bf16.xpose.msra.mxu0 0
        %547 = vmatprep.subr.bf16.mxu0 0
        %548 = vmatpush1.bf16.xpose.msra.mxu0 0
        %549 = vmatprep.subr.bf16.mxu0 0
        %550 = vmatpush1.bf16.xpose.msra.mxu0 0
        %551 = vmatprep.subr.bf16.mxu0 0
        %552 = vmatpush1.bf16.xpose.msra.mxu0 0
        %553 = vmatprep.subr.bf16.mxu0 0
        %554 = vmatpush1.bf16.xpose.msra.mxu0 0
        %555 = vmatprep.subr.bf16.mxu0 0
        %556 = vmatpush1.bf16.xpose.msra.mxu0 0
        %557 = vmatprep.subr.bf16.mxu0 0
        %558 = vmatpush1.bf16.xpose.msra.mxu0 0
        %559 = vmatprep.subr.bf16.mxu0 0
        %560 = vmatpush1.bf16.xpose.msra.mxu0 0
        %561 = vmatprep.mubr.bf16.mxu0 0
        %562 = vmatmul.mubr.bf16.gmra.mrb[0].mxu0 %v524
        %v563 = vpop.f32.mrb[0].mxu0
        %v564 = vadd.f32 %v521, %v563
        %v565 = vpop.f32.mrb[0].mxu0
        %v566 = vpop.f32.mrb[0].mxu0
        %v567 = vpop.f32.mrb[0].mxu0
        %568 = vdwg.mxu0
        %vm569 = vcmask 64512
        %v570 = vsel %vm569, %v564, -inf
        %571 = vmax.xlane.f32.xlu0 %v570
        %v572 = vpop.xlane.xlu0 %571
        %v573 = vsub.f32 %v564, %v572
        %v574 = vmul.f32 %v573, 1.442695
        %v575 = vpow.pop %v574
        %v576 = vsel %vm569, %v575, 0.0
        %577 = vadd.xlane.f32.xlu0 %v576
        %v578 = vpop.xlane.xlu0 %577
        %v579 = vrcp.pop %v578
        %v580 = vmul.f32 %v575, %v579
        %v581 = vpack.c.bf16 %v580, %v580
        %583 = vrot.lane.b32.xlu0 %v519, 64
        %v584 = vpop.permute.xlu0 %583
        %v586 = vsel %vm569, %v581, 0
        %vm588 = vcmask 1043456
        %v590 = vsel %vm588, %v584, 0
        %592 = vmatprep.subr.bf16.mxu0 0
        %593 = vmatpush1.bf16.msra.mxu0 %v590
        %594 = vmatprep.subr.bf16.mxu0 0
        %595 = vmatpush1.bf16.msra.mxu0 0
        %596 = vmatprep.subr.bf16.mxu0 0
        %597 = vmatpush1.bf16.msra.mxu0 0
        %598 = vmatprep.subr.bf16.mxu0 0
        %599 = vmatpush1.bf16.msra.mxu0 0
        %600 = vmatprep.subr.bf16.mxu0 0
        %601 = vmatpush1.bf16.msra.mxu0 0
        %602 = vmatprep.subr.bf16.mxu0 0
        %603 = vmatpush1.bf16.msra.mxu0 0
        %604 = vmatprep.subr.bf16.mxu0 0
        %605 = vmatpush1.bf16.msra.mxu0 0
        %606 = vmatprep.subr.bf16.mxu0 0
        %607 = vmatpush1.bf16.msra.mxu0 0
        %608 = vmatprep.subr.bf16.mxu0 0
        %609 = vmatpush1.bf16.msra.mxu0 0
        %610 = vmatprep.subr.bf16.mxu0 0
        %611 = vmatpush1.bf16.msra.mxu0 0
        %612 = vmatprep.subr.bf16.mxu0 0
        %613 = vmatpush1.bf16.msra.mxu0 0
        %614 = vmatprep.subr.bf16.mxu0 0
        %615 = vmatpush1.bf16.msra.mxu0 0
        %616 = vmatprep.subr.bf16.mxu0 0
        %617 = vmatpush1.bf16.msra.mxu0 0
        %618 = vmatprep.subr.bf16.mxu0 0
        %619 = vmatpush1.bf16.msra.mxu0 0
        %620 = vmatprep.subr.bf16.mxu0 0
        %621 = vmatpush1.bf16.msra.mxu0 0
        %622 = vmatprep.subr.bf16.mxu0 0
        %623 = vmatpush1.bf16.msra.mxu0 0
        %624 = vmatprep.mubr.bf16.mxu0 0
        %625 = vmatmul.mubr.bf16.gmra.mrb[0].mxu0 %v586
        %v626 = vpop.f32.mrb[0].mxu0
        %v627 = vadd.f32 0.0, %v626
        %v628 = vpop.f32.mrb[0].mxu0
        %v629 = vpop.f32.mrb[0].mxu0
        %v630 = vpop.f32.mrb[0].mxu0
        %631 = vdwg.mxu0
        %633 = vrot.lane.b32.xlu0 %v518, 112
        %v634 = vpop.permute.xlu0 %633
        %635 = vrot.lane.b32.xlu0 %v519, 112
        %v636 = vpop.permute.xlu0 %635
        %v638 = vsel %vm522, %v634, 0
        %v641 = vsel %vm522, %v636, 0
        %643 = vmatprep.subr.bf16.mxu0 0
        %644 = vmatpush1.bf16.xpose.msra.mxu0 %v641
        %645 = vmatprep.subr.bf16.mxu0 0
        %646 = vmatpush1.bf16.xpose.msra.mxu0 0
        %647 = vmatprep.subr.bf16.mxu0 0
        %648 = vmatpush1.bf16.xpose.msra.mxu0 0
        %649 = vmatprep.subr.bf16.mxu0 0
        %650 = vmatpush1.bf16.xpose.msra.mxu0 0
        %651 = vmatprep.subr.bf16.mxu0 0
        %652 = vmatpush1.bf16.xpose.msra.mxu0 0
        %653 = vmatprep.subr.bf16.mxu0 0
        %654 = vmatpush1.bf16.xpose.msra.mxu0 0
        %655 = vmatprep.subr.bf16.mxu0 0
        %656 = vmatpush1.bf16.xpose.msra.mxu0 0
        %657 = vmatprep.subr.bf16.mxu0 0
        %658 = vmatpush1.bf16.xpose.msra.mxu0 0
        %659 = vmatprep.subr.bf16.mxu0 0
        %660 = vmatpush1.bf16.xpose.msra.mxu0 0
        %661 = vmatprep.subr.bf16.mxu0 0
        %662 = vmatpush1.bf16.xpose.msra.mxu0 0
        %663 = vmatprep.subr.bf16.mxu0 0
        %664 = vmatpush1.bf16.xpose.msra.mxu0 0
        %665 = vmatprep.subr.bf16.mxu0 0
        %666 = vmatpush1.bf16.xpose.msra.mxu0 0
        %667 = vmatprep.subr.bf16.mxu0 0
        %668 = vmatpush1.bf16.xpose.msra.mxu0 0
        %669 = vmatprep.subr.bf16.mxu0 0
        %670 = vmatpush1.bf16.xpose.msra.mxu0 0
        %671 = vmatprep.subr.bf16.mxu0 0
        %672 = vmatpush1.bf16.xpose.msra.mxu0 0
        %673 = vmatprep.subr.bf16.mxu0 0
        %674 = vmatpush1.bf16.xpose.msra.mxu0 0
        %675 = vmatprep.mubr.bf16.mxu0 0
        %676 = vmatmul.mubr.bf16.gmra.mrb[0].mxu0 %v638
        %v677 = vpop.f32.mrb[0].mxu0
        %v678 = vadd.f32 %v521, %v677
        %v679 = vpop.f32.mrb[0].mxu0
        %v680 = vpop.f32.mrb[0].mxu0
        %v681 = vpop.f32.mrb[0].mxu0
        %682 = vdwg.mxu0
        %v683 = vsel %vm569, %v678, -inf
        %684 = vmax.xlane.f32.xlu0 %v683
        %v685 = vpop.xlane.xlu0 %684
        %v686 = vsub.f32 %v678, %v685
        %v687 = vmul.f32 %v686, 1.442695
        %v688 = vpow.pop %v687
        %v689 = vsel %vm569, %v688, 0.0
        %690 = vadd.xlane.f32.xlu0 %v689
        %v691 = vpop.xlane.xlu0 %690
        %v692 = vrcp.pop %v691
        %v693 = vmul.f32 %v688, %v692
        %v694 = vpack.c.bf16 %v693, %v693
        %695 = vrot.lane.b32.xlu0 %v519, 48
        %v696 = vpop.permute.xlu0 %695
        %v698 = vsel %vm569, %v694, 0
        %v701 = vsel %vm588, %v696, 0
        %703 = vmatprep.subr.bf16.mxu0 0
        %704 = vmatpush1.bf16.msra.mxu0 %v701
        %705 = vmatprep.subr.bf16.mxu0 0
        %706 = vmatpush1.bf16.msra.mxu0 0
        %707 = vmatprep.subr.bf16.mxu0 0
        %708 = vmatpush1.bf16.msra.mxu0 0
        %709 = vmatprep.subr.bf16.mxu0 0
        %710 = vmatpush1.bf16.msra.mxu0 0
        %711 = vmatprep.subr.bf16.mxu0 0
        %712 = vmatpush1.bf16.msra.mxu0 0
        %713 = vmatprep.subr.bf16.mxu0 0
        %714 = vmatpush1.bf16.msra.mxu0 0
        %715 = vmatprep.subr.bf16.mxu0 0
        %716 = vmatpush1.bf16.msra.mxu0 0
        %717 = vmatprep.subr.bf16.mxu0 0
        %718 = vmatpush1.bf16.msra.mxu0 0
        %719 = vmatprep.subr.bf16.mxu0 0
        %720 = vmatpush1.bf16.msra.mxu0 0
        %721 = vmatprep.subr.bf16.mxu0 0
        %722 = vmatpush1.bf16.msra.mxu0 0
        %723 = vmatprep.subr.bf16.mxu0 0
        %724 = vmatpush1.bf16.msra.mxu0 0
        %725 = vmatprep.subr.bf16.mxu0 0
        %726 = vmatpush1.bf16.msra.mxu0 0
        %727 = vmatprep.subr.bf16.mxu0 0
        %728 = vmatpush1.bf16.msra.mxu0 0
        %729 = vmatprep.subr.bf16.mxu0 0
        %730 = vmatpush1.bf16.msra.mxu0 0
        %731 = vmatprep.subr.bf16.mxu0 0
        %732 = vmatpush1.bf16.msra.mxu0 0
        %733 = vmatprep.subr.bf16.mxu0 0
        %734 = vmatpush1.bf16.msra.mxu0 0
        %735 = vmatprep.mubr.bf16.mxu0 0
        %736 = vmatmul.mubr.bf16.gmra.mrb[0].mxu0 %v698
        %v737 = vpop.f32.mrb[0].mxu0
        %v738 = vadd.f32 0.0, %v737
        %v739 = vpop.f32.mrb[0].mxu0
        %v740 = vpop.f32.mrb[0].mxu0
        %v741 = vpop.f32.mrb[0].mxu0
        %742 = vdwg.mxu0
        %743 = vrot.lane.b32.xlu0 %v518, 96
        %v744 = vpop.permute.xlu0 %743
        %745 = vrot.lane.b32.xlu0 %v519, 96
        %v746 = vpop.permute.xlu0 %745
        %v748 = vsel %vm522, %v744, 0
        %v751 = vsel %vm522, %v746, 0
        %753 = vmatprep.subr.bf16.mxu0 0
        %754 = vmatpush1.bf16.xpose.msra.mxu0 %v751
        %755 = vmatprep.subr.bf16.mxu0 0
        %756 = vmatpush1.bf16.xpose.msra.mxu0 0
        %757 = vmatprep.subr.bf16.mxu0 0
        %758 = vmatpush1.bf16.xpose.msra.mxu0 0
        %759 = vmatprep.subr.bf16.mxu0 0
        %760 = vmatpush1.bf16.xpose.msra.mxu0 0
        %761 = vmatprep.subr.bf16.mxu0 0
        %762 = vmatpush1.bf16.xpose.msra.mxu0 0
        %763 = vmatprep.subr.bf16.mxu0 0
        %764 = vmatpush1.bf16.xpose.msra.mxu0 0
        %765 = vmatprep.subr.bf16.mxu0 0
        %766 = vmatpush1.bf16.xpose.msra.mxu0 0
        %767 = vmatprep.subr.bf16.mxu0 0
        %768 = vmatpush1.bf16.xpose.msra.mxu0 0
        %769 = vmatprep.subr.bf16.mxu0 0
        %770 = vmatpush1.bf16.xpose.msra.mxu0 0
        %771 = vmatprep.subr.bf16.mxu0 0
        %772 = vmatpush1.bf16.xpose.msra.mxu0 0
        %773 = vmatprep.subr.bf16.mxu0 0
        %774 = vmatpush1.bf16.xpose.msra.mxu0 0
        %775 = vmatprep.subr.bf16.mxu0 0
        %776 = vmatpush1.bf16.xpose.msra.mxu0 0
        %777 = vmatprep.subr.bf16.mxu0 0
        %778 = vmatpush1.bf16.xpose.msra.mxu0 0
        %779 = vmatprep.subr.bf16.mxu0 0
        %780 = vmatpush1.bf16.xpose.msra.mxu0 0
        %781 = vmatprep.subr.bf16.mxu0 0
        %782 = vmatpush1.bf16.xpose.msra.mxu0 0
        %783 = vmatprep.subr.bf16.mxu0 0
        %784 = vmatpush1.bf16.xpose.msra.mxu0 0
        %785 = vmatprep.mubr.bf16.mxu0 0
        %786 = vmatmul.mubr.bf16.gmra.mrb[0].mxu0 %v748
        %v787 = vpop.f32.mrb[0].mxu0
        %v788 = vadd.f32 %v521, %v787
        %v789 = vpop.f32.mrb[0].mxu0
        %v790 = vpop.f32.mrb[0].mxu0
        %v791 = vpop.f32.mrb[0].mxu0
        %792 = vdwg.mxu0
        %v793 = vsel %vm569, %v788, -inf
        %794 = vmax.xlane.f32.xlu0 %v793
        %v795 = vpop.xlane.xlu0 %794
        %v796 = vsub.f32 %v788, %v795
        %v797 = vmul.f32 %v796, 1.442695
        %v798 = vpow.pop %v797
        %v799 = vsel %vm569, %v798, 0.0
        %800 = vadd.xlane.f32.xlu0 %v799
        %v801 = vpop.xlane.xlu0 %800
        %v802 = vrcp.pop %v801
        %v803 = vmul.f32 %v798, %v802
        %v804 = vpack.c.bf16 %v803, %v803
        %805 = vrot.lane.b32.xlu0 %v519, 32
        %v806 = vpop.permute.xlu0 %805
        %v808 = vsel %vm569, %v804, 0
        %v811 = vsel %vm588, %v806, 0
        %813 = vmatprep.subr.bf16.mxu0 0
        %814 = vmatpush1.bf16.msra.mxu0 %v811
        %815 = vmatprep.subr.bf16.mxu0 0
        %816 = vmatpush1.bf16.msra.mxu0 0
        %817 = vmatprep.subr.bf16.mxu0 0
        %818 = vmatpush1.bf16.msra.mxu0 0
        %819 = vmatprep.subr.bf16.mxu0 0
        %820 = vmatpush1.bf16.msra.mxu0 0
        %821 = vmatprep.subr.bf16.mxu0 0
        %822 = vmatpush1.bf16.msra.mxu0 0
        %823 = vmatprep.subr.bf16.mxu0 0
        %824 = vmatpush1.bf16.msra.mxu0 0
        %825 = vmatprep.subr.bf16.mxu0 0
        %826 = vmatpush1.bf16.msra.mxu0 0
        %827 = vmatprep.subr.bf16.mxu0 0
        %828 = vmatpush1.bf16.msra.mxu0 0
        %829 = vmatprep.subr.bf16.mxu0 0
        %830 = vmatpush1.bf16.msra.mxu0 0
        %831 = vmatprep.subr.bf16.mxu0 0
        %832 = vmatpush1.bf16.msra.mxu0 0
        %833 = vmatprep.subr.bf16.mxu0 0
        %834 = vmatpush1.bf16.msra.mxu0 0
        %835 = vmatprep.subr.bf16.mxu0 0
        %836 = vmatpush1.bf16.msra.mxu0 0
        %837 = vmatprep.subr.bf16.mxu0 0
        %838 = vmatpush1.bf16.msra.mxu0 0
        %839 = vmatprep.subr.bf16.mxu0 0
        %840 = vmatpush1.bf16.msra.mxu0 0
        %841 = vmatprep.subr.bf16.mxu0 0
        %842 = vmatpush1.bf16.msra.mxu0 0
        %843 = vmatprep.subr.bf16.mxu0 0
        %844 = vmatpush1.bf16.msra.mxu0 0
        %845 = vmatprep.mubr.bf16.mxu0 0
        %846 = vmatmul.mubr.bf16.gmra.mrb[0].mxu0 %v808
        %v847 = vpop.f32.mrb[0].mxu0
        %v848 = vadd.f32 0.0, %v847
        %v849 = vpop.f32.mrb[0].mxu0
        %v850 = vpop.f32.mrb[0].mxu0
        %v851 = vpop.f32.mrb[0].mxu0
        %852 = vdwg.mxu0
        %853 = vrot.lane.b32.xlu0 %v518, 80
        %v854 = vpop.permute.xlu0 %853
        %855 = vrot.lane.b32.xlu0 %v519, 80
        %v856 = vpop.permute.xlu0 %855
        %v858 = vsel %vm522, %v854, 0
        %v861 = vsel %vm522, %v856, 0
        %863 = vmatprep.subr.bf16.mxu0 0
        %864 = vmatpush1.bf16.xpose.msra.mxu0 %v861
        %865 = vmatprep.subr.bf16.mxu0 0
        %866 = vmatpush1.bf16.xpose.msra.mxu0 0
        %867 = vmatprep.subr.bf16.mxu0 0
        %868 = vmatpush1.bf16.xpose.msra.mxu0 0
        %869 = vmatprep.subr.bf16.mxu0 0
        %870 = vmatpush1.bf16.xpose.msra.mxu0 0
        %871 = vmatprep.subr.bf16.mxu0 0
        %872 = vmatpush1.bf16.xpose.msra.mxu0 0
        %873 = vmatprep.subr.bf16.mxu0 0
        %874 = vmatpush1.bf16.xpose.msra.mxu0 0
        %875 = vmatprep.subr.bf16.mxu0 0
        %876 = vmatpush1.bf16.xpose.msra.mxu0 0
        %877 = vmatprep.subr.bf16.mxu0 0
        %878 = vmatpush1.bf16.xpose.msra.mxu0 0
        %879 = vmatprep.subr.bf16.mxu0 0
        %880 = vmatpush1.bf16.xpose.msra.mxu0 0
        %881 = vmatprep.subr.bf16.mxu0 0
        %882 = vmatpush1.bf16.xpose.msra.mxu0 0
        %883 = vmatprep.subr.bf16.mxu0 0
        %884 = vmatpush1.bf16.xpose.msra.mxu0 0
        %885 = vmatprep.subr.bf16.mxu0 0
        %886 = vmatpush1.bf16.xpose.msra.mxu0 0
        %887 = vmatprep.subr.bf16.mxu0 0
        %888 = vmatpush1.bf16.xpose.msra.mxu0 0
        %889 = vmatprep.subr.bf16.mxu0 0
        %890 = vmatpush1.bf16.xpose.msra.mxu0 0
        %891 = vmatprep.subr.bf16.mxu0 0
        %892 = vmatpush1.bf16.xpose.msra.mxu0 0
        %893 = vmatprep.subr.bf16.mxu0 0
        %894 = vmatpush1.bf16.xpose.msra.mxu0 0
        %895 = vmatprep.mubr.bf16.mxu0 0
        %896 = vmatmul.mubr.bf16.gmra.mrb[0].mxu0 %v858
        %v897 = vpop.f32.mrb[0].mxu0
        %v898 = vadd.f32 %v521, %v897
        %v899 = vpop.f32.mrb[0].mxu0
        %v900 = vpop.f32.mrb[0].mxu0
        %v901 = vpop.f32.mrb[0].mxu0
        %902 = vdwg.mxu0
        %v903 = vsel %vm569, %v898, -inf
        %904 = vmax.xlane.f32.xlu0 %v903
        %v905 = vpop.xlane.xlu0 %904
        %v906 = vsub.f32 %v898, %v905
        %v907 = vmul.f32 %v906, 1.442695
        %v908 = vpow.pop %v907
        %v909 = vsel %vm569, %v908, 0.0
        %910 = vadd.xlane.f32.xlu0 %v909
        %v911 = vpop.xlane.xlu0 %910
        %v912 = vrcp.pop %v911
        %v913 = vmul.f32 %v908, %v912
        %v914 = vpack.c.bf16 %v913, %v913
        %915 = vrot.lane.b32.xlu0 %v519, 16
        %v916 = vpop.permute.xlu0 %915
        %v918 = vsel %vm569, %v914, 0
        %v921 = vsel %vm588, %v916, 0
        %923 = vmatprep.subr.bf16.mxu0 0
        %924 = vmatpush1.bf16.msra.mxu0 %v921
        %925 = vmatprep.subr.bf16.mxu0 0
        %926 = vmatpush1.bf16.msra.mxu0 0
        %927 = vmatprep.subr.bf16.mxu0 0
        %928 = vmatpush1.bf16.msra.mxu0 0
        %929 = vmatprep.subr.bf16.mxu0 0
        %930 = vmatpush1.bf16.msra.mxu0 0
        %931 = vmatprep.subr.bf16.mxu0 0
        %932 = vmatpush1.bf16.msra.mxu0 0
        %933 = vmatprep.subr.bf16.mxu0 0
        %934 = vmatpush1.bf16.msra.mxu0 0
        %935 = vmatprep.subr.bf16.mxu0 0
        %936 = vmatpush1.bf16.msra.mxu0 0
        %937 = vmatprep.subr.bf16.mxu0 0
        %938 = vmatpush1.bf16.msra.mxu0 0
        %939 = vmatprep.subr.bf16.mxu0 0
        %940 = vmatpush1.bf16.msra.mxu0 0
        %941 = vmatprep.subr.bf16.mxu0 0
        %942 = vmatpush1.bf16.msra.mxu0 0
        %943 = vmatprep.subr.bf16.mxu0 0
        %944 = vmatpush1.bf16.msra.mxu0 0
        %945 = vmatprep.subr.bf16.mxu0 0
        %946 = vmatpush1.bf16.msra.mxu0 0
        %947 = vmatprep.subr.bf16.mxu0 0
        %948 = vmatpush1.bf16.msra.mxu0 0
        %949 = vmatprep.subr.bf16.mxu0 0
        %950 = vmatpush1.bf16.msra.mxu0 0
        %951 = vmatprep.subr.bf16.mxu0 0
        %952 = vmatpush1.bf16.msra.mxu0 0
        %953 = vmatprep.subr.bf16.mxu0 0
        %954 = vmatpush1.bf16.msra.mxu0 0
        %955 = vmatprep.mubr.bf16.mxu0 0
        %956 = vmatmul.mubr.bf16.gmra.mrb[0].mxu0 %v918
        %v957 = vpop.f32.mrb[0].mxu0
        %v958 = vadd.f32 0.0, %v957
        %v959 = vpop.f32.mrb[0].mxu0
        %v960 = vpop.f32.mrb[0].mxu0
        %v961 = vpop.f32.mrb[0].mxu0
        %962 = vdwg.mxu0
        %964 = vrot.lane.b32.xlu0 %v738, 16
        %v965 = vpop.permute.xlu0 %964
        %968 = vrot.lane.b32.xlu0 %v848, 32
        %v969 = vpop.permute.xlu0 %968
        %972 = vrot.lane.b32.xlu0 %v958, 48
        %v973 = vpop.permute.xlu0 %972
        %v975 = vsel %vm522, %v627, %v965
        %v976 = vsel %vm408, %v975, %v969
        %vm977 = vcmask 392192
        %v978 = vsel %vm977, %v976, %v973
        %vm979 = vcmask 523264
        %980 = vst.msk [vmem:[%s379] sm:$0xff] %vm979, %v978
        %s981 = sand.u32 %s198, 1
        %s982 = scalar_lea.sflag [#allocation4], %s981
        %s983 = sand.u32 %s198, 1
        %s984 = smul.addr %s983, 8
        %s985 = scalar_lea.vmem [#allocation10], %s984
        // Predicated region
        $region65: #{tpu_custom_call.1} parent=47 // pred_check
          %p986 = pneg %p208
        $region66: #{tpu_custom_call.1} parent=47 // pred_check_branch
          %988 = sbr.rel (%p986) target = $region68
        $region67: #{tpu_custom_call.1} parent=47 // pred_region
          %s990 = ssub.s32 128, 128
          %991 = vsyncadd %s982, %s990
          %s992 = smul.addr %s28, 128
          %s993 = scalar_lea.hbm %s7, %s992
          %s995 = sshll.u32 %s985, 4
          %s996 = int_to_ptr.vmem [resolvable:$true] %s995
          %998 = dma.vmem_to_hbm [thread:$0]  %s996, 128, %s993, %s982
        $region68: #{tpu_custom_call.1} parent=47 // pred_fallthru
          _
      $region48: #{tpu_custom_call.1} parent=5 // pred_fallthru
        _
      %p999 = scmp.le.s32.totalorder 2, %s23
      // Predicated region
      $region69: #{tpu_custom_call.1} parent=5 // pred_check
        %p1000 = pneg %p999
      $region70: #{tpu_custom_call.1} parent=5 // pred_check_branch
        %1002 = sbr.rel (%p1000) target = $region72
      $region71: #{tpu_custom_call.1} parent=5 // pred_region
        %s1003 = ssub.s32 %s23, 2
        // Predicated region
        $region73: #{tpu_custom_call.1} parent=71 // pred_check
          %p1004 = pneg %p214
        $region74: #{tpu_custom_call.1} parent=71 // pred_check_branch
          %1006 = sbr.rel (%p1004) target = $region76
        $region75: #{tpu_custom_call.1} parent=71 // pred_region
          %s1007 = sand.u32 %s199, 1
          %s1008 = scalar_lea.sflag [#allocation4], %s1007
          %s1009 = sand.u32 %s199, 1
          %s1010 = smul.addr %s1009, 8
          %s1011 = scalar_lea.vmem [#allocation10], %s1010
          %1012 = dma.done %s1008, 128
        $region76: #{tpu_custom_call.1} parent=71 // pred_fallthru
          _
      $region72: #{tpu_custom_call.1} parent=5 // pred_fallthru
        _
    $region6: #{tpu_custom_call.1} parent=1 // loop_footer
      %s27 = sadd.s32 1, %s23
    $region7: #{tpu_custom_call.1} parent=1 // loop_footer_branch
      %22 = sbr.rel target = $region3
    $region8: #{tpu_custom_call.1} parent=1 // loop_exit
      _
    %1013 = vsyncpa [#allocation3], 1
    %s1014 = scalar_lea.sflag [#allocation3], 1
    %1015 = vsyncpa %s1014, 1
    %1016 = vsyncpa [#allocation6], 1
    %s1017 = scalar_lea.sflag [#allocation6], 1
    %1018 = vsyncpa %s1017, 1
    %1019 = vsyncpa [#allocation9], 1
    %1020 = vsyncpa [#allocation4], 1
    %s1021 = scalar_lea.sflag [#allocation4], 1
    %1022 = vsyncpa %s1021, 1

</llo_original>
